<compile_context>
chip_gen: v5e
topology: v5e:2x2
jax: 0.10.0
libtpu: 0.0.40
codegen_flags: <defaults>
</compile_context>

<pallas_src>
import functools
import math

import jax
import jax.numpy as jnp
from jax.experimental import pallas as pl
from jax.experimental.pallas import tpu as pltpu


# ------------------------------- tiling helper ------------------------------

def _tile(dim, target):
    """Largest tile <= target that evenly divides dim (falls back to full dim).
    NOTE: for awkward deployment shapes this can return the full dim; re-check
    VMEM budget (esp. v7x 32 MiB scoped) if that happens at large sizes."""
    if dim <= target:
        return dim
    for t in (target, target // 2, target // 4, 256, 128, 64, 32, 16, 8):
        if t >= 8 and dim % t == 0:
            return t
    return dim


_MM3 = ("parallel", "parallel", "arbitrary")
_MM4 = ("parallel", "parallel", "parallel", "arbitrary")


# ----------------------------- RMS-norm kernels -----------------------------

def _rms_bf16_kernel(x_ref, o_ref):
    # T5 RMSNorm (eps=1e-6) without gamma (gamma is folded into the consumer
    # weights); emits the normalized activation in bf16 for the next matmul.
    x = x_ref[...]
    s = jax.lax.rsqrt(jnp.mean(x * x, axis=-1, keepdims=True) + 1e-6)
    o_ref[...] = (x * s).astype(o_ref.dtype)


def pallas_rms_bf16(x):
    M, D = x.shape
    tm = _tile(M, 512)
    return pl.pallas_call(
        _rms_bf16_kernel,
        out_shape=jax.ShapeDtypeStruct((M, D), jnp.bfloat16),
        grid=(M // tm,),
        in_specs=[pl.BlockSpec((tm, D), lambda i: (i, 0))],
        out_specs=pl.BlockSpec((tm, D), lambda i: (i, 0)),
        compiler_params=pltpu.CompilerParams(dimension_semantics=("parallel",)),
    )(x)


def _rmsnorm_kernel(x_ref, g_ref, o_ref):
    # Final layer norm (f32 output, gamma applied in f32).
    x = x_ref[...]
    var = jnp.mean(x * x, axis=-1, keepdims=True)
    o_ref[...] = (x * jax.lax.rsqrt(var + 1e-6)) * g_ref[...]


def pallas_rmsnorm(x, gamma):
    M, D = x.shape
    tm = _tile(M, 512)
    return pl.pallas_call(
        _rmsnorm_kernel,
        out_shape=jax.ShapeDtypeStruct((M, D), jnp.float32),
        grid=(M // tm,),
        in_specs=[pl.BlockSpec((tm, D), lambda i: (i, 0)),
                  pl.BlockSpec((1, D), lambda i: (0, 0))],
        out_specs=pl.BlockSpec((tm, D), lambda i: (i, 0)),
        compiler_params=pltpu.CompilerParams(dimension_semantics=("parallel",)),
    )(x, gamma.reshape(1, D))


# ------------------------------ matmul kernels -------------------------------

def _mm_kernel(x_ref, w_ref, o_ref, acc_ref, *, red_axis):
    @pl.when(pl.program_id(red_axis) == 0)
    def _():
        acc_ref[...] = jnp.zeros_like(acc_ref)

    acc_ref[...] += jnp.dot(x_ref[...], w_ref[...],
                            preferred_element_type=jnp.float32)

    @pl.when(pl.program_id(red_axis) == pl.num_programs(red_axis) - 1)
    def _():
        o_ref[...] = acc_ref[...].astype(o_ref.dtype)


def pallas_qkv_matmul(x_bf16, wqkv_bf16):
    """x: (M, D) bf16, wqkv: (3, D, inner) bf16 -> (3, M, inner) bf16.

    Output layout is exactly what attention consumes (leading axis selects
    q/k/v), so no jnp.split / transpose glue is needed downstream."""
    M, K = x_bf16.shape
    _, _, N = wqkv_bf16.shape
    tm, tn, tk = _tile(M, 256), _tile(N, 512), _tile(K, 512)
    return pl.pallas_call(
        functools.partial(_mm_kernel, red_axis=3),
        out_shape=jax.ShapeDtypeStruct((3, M, N), jnp.bfloat16),
        grid=(M // tm, 3, N // tn, K // tk),
        in_specs=[pl.BlockSpec((tm, tk), lambda i, g, j, k: (i, k)),
                  pl.BlockSpec((None, tk, tn), lambda i, g, j, k: (g, k, j))],
        out_specs=pl.BlockSpec((None, tm, tn), lambda i, g, j, k: (g, i, j)),
        scratch_shapes=[pltpu.VMEM((tm, tn), jnp.float32)],
        compiler_params=pltpu.CompilerParams(dimension_semantics=_MM4),
    )(x_bf16, wqkv_bf16)


def _mm_geglu_kernel(x_ref, wa_ref, wg_ref, o_ref, a_acc, g_acc):
    # Fused wi0/wi1 projections + gated "gelu_new" epilogue (bf16 output).
    @pl.when(pl.program_id(2) == 0)
    def _():
        a_acc[...] = jnp.zeros_like(a_acc)
        g_acc[...] = jnp.zeros_like(g_acc)

    x = x_ref[...]
    a_acc[...] += jnp.dot(x, wa_ref[...], preferred_element_type=jnp.float32)
    g_acc[...] += jnp.dot(x, wg_ref[...], preferred_element_type=jnp.float32)

    @pl.when(pl.program_id(2) == pl.num_programs(2) - 1)
    def _():
        a = a_acc[...]
        gelu = 0.5 * a * (1.0 + jnp.tanh(0.7978845608028654
                                         * (a + 0.044715 * a * a * a)))
        o_ref[...] = (gelu * g_acc[...]).astype(o_ref.dtype)


def pallas_matmul_geglu(x_bf16, wa_bf16, wg_bf16):
    M, K = x_bf16.shape
    _, N = wa_bf16.shape
    tm, tn, tk = _tile(M, 256), _tile(N, 512), _tile(K, 512)
    return pl.pallas_call(
        _mm_geglu_kernel,
        out_shape=jax.ShapeDtypeStruct((M, N), jnp.bfloat16),
        grid=(M // tm, N // tn, K // tk),
        in_specs=[pl.BlockSpec((tm, tk), lambda i, j, k: (i, k)),
                  pl.BlockSpec((tk, tn), lambda i, j, k: (k, j)),
                  pl.BlockSpec((tk, tn), lambda i, j, k: (k, j))],
        out_specs=pl.BlockSpec((tm, tn), lambda i, j, k: (i, j)),
        scratch_shapes=[pltpu.VMEM((tm, tn), jnp.float32),
                        pltpu.VMEM((tm, tn), jnp.float32)],
        compiler_params=pltpu.CompilerParams(dimension_semantics=_MM3),
    )(x_bf16, wa_bf16, wg_bf16)


def _mm_res_norm_kernel(x_ref, w_ref, r_ref, h_ref, n_ref, acc_ref):
    # bf16 matmul + residual add + row RMS normalization fused in the epilogue.
    # tn == d_model, so the whole row is present for the mean(x^2) reduction.
    @pl.when(pl.program_id(1) == 0)
    def _():
        acc_ref[...] = jnp.zeros_like(acc_ref)

    acc_ref[...] += jnp.dot(x_ref[...], w_ref[...],
                            preferred_element_type=jnp.float32)

    @pl.when(pl.program_id(1) == pl.num_programs(1) - 1)
    def _():
        h = acc_ref[...] + r_ref[...]
        s = jax.lax.rsqrt(jnp.mean(h * h, axis=-1, keepdims=True) + 1e-6)
        h_ref[...] = h                              # f32 residual stream
        n_ref[...] = (h * s).astype(n_ref.dtype)    # bf16 pre-normed activation


def pallas_matmul_residual_norm(x_bf16, w_bf16, residual_f32):
    """Returns (new_hidden_f32, normalized_hidden_bf16)."""
    M, K = x_bf16.shape
    _, N = w_bf16.shape          # N == d_model (kept whole for the row reduction)
    tm, tk = _tile(M, 256), _tile(K, 512)
    return pl.pallas_call(
        _mm_res_norm_kernel,
        out_shape=(jax.ShapeDtypeStruct((M, N), jnp.float32),
                   jax.ShapeDtypeStruct((M, N), jnp.bfloat16)),
        grid=(M // tm, K // tk),
        in_specs=[pl.BlockSpec((tm, tk), lambda i, k: (i, k)),
                  pl.BlockSpec((tk, N), lambda i, k: (k, 0)),
                  pl.BlockSpec((tm, N), lambda i, k: (i, 0))],
        out_specs=(pl.BlockSpec((tm, N), lambda i, k: (i, 0)),
                   pl.BlockSpec((tm, N), lambda i, k: (i, 0))),
        scratch_shapes=[pltpu.VMEM((tm, N), jnp.float32)],
        compiler_params=pltpu.CompilerParams(
            dimension_semantics=("parallel", "arbitrary")),
    )(x_bf16, w_bf16, residual_f32)


# ------------------------------- attention ----------------------------------

def pallas_attention(qkv3, bias_bf16, B, S, H, Dh):
    """qkv3: (3, B*S, H*Dh) bf16, bias: (H, S, S) bf16 -> (B*S, H*Dh) bf16.

    T5 attention: no 1/sqrt(d) scaling; additive relative-position bias.
    Processes `hps` heads per grid step so blocks are 128-lane dense at real
    T5 shapes (d_kv=64 -> hps=2 -> 128-wide blocks); output is written straight
    into the (M, inner) layout the wo matmul consumes."""
    inner = H * Dh
    M = B * S
    hps = math.gcd(H, max(1, 128 // max(Dh, 1)))   # heads per grid step
    hg = H // hps
    bw = hps * Dh

    def attn_kernel(q_ref, k_ref, v_ref, b_ref, o_ref):
        q = q_ref[...]
        k = k_ref[...]
        v = v_ref[...]
        outs = []
        for h in range(hps):                        # static, small
            sl = slice(h * Dh, (h + 1) * Dh)
            s = jax.lax.dot_general(q[:, sl], k[:, sl], (((1,), (1,)), ((), ())),
                                    preferred_element_type=jnp.float32)
            s = s + b_ref[h].astype(jnp.float32)
            m = jnp.max(s, axis=-1, keepdims=True)
            p = jnp.exp(s - m)
            den = jnp.sum(p, axis=-1, keepdims=True)
            # approx reciprocal (EUP slot): ~1e-3 rel. error vs exact softmax.
            p = (p * pl.reciprocal(den, approx=True)).astype(jnp.bfloat16)
            outs.append(jnp.dot(p, v[:, sl], preferred_element_type=jnp.float32))
        o_ref[...] = jnp.concatenate(outs, axis=-1).astype(o_ref.dtype)

    # Grid (head-group, batch): the bias block depends only on the head axis,
    # so it stays resident in VMEM across the inner batch axis.
    # TODO(synk): flash-style KV-tiled online softmax for long sequences (the
    # (S,S) score + bias blocks must fit VMEM; v7x hits its 32 MiB scoped limit
    # at roughly half the S of v5e/v6e).
    return pl.pallas_call(
        attn_kernel,
        out_shape=jax.ShapeDtypeStruct((M, inner), jnp.bfloat16),
        grid=(hg, B),
        in_specs=[pl.BlockSpec((None, S, bw), lambda g, b: (0, b, g)),
                  pl.BlockSpec((None, S, bw), lambda g, b: (1, b, g)),
                  pl.BlockSpec((None, S, bw), lambda g, b: (2, b, g)),
                  pl.BlockSpec((hps, S, S), lambda g, b: (g, 0, 0))],
        out_specs=pl.BlockSpec((S, bw), lambda g, b: (b, g)),
        compiler_params=pltpu.CompilerParams(
            dimension_semantics=("parallel", "parallel")),
    )(qkv3, qkv3, qkv3, bias_bf16)


# --------------------- T5 encoder glue (plain JAX setup) --------------------

def _relative_position_bucket(rel_pos, num_buckets, max_distance):
    # HF T5, bidirectional=True.
    num_buckets = num_buckets // 2
    buckets = jnp.where(rel_pos > 0, num_buckets, 0)
    n = jnp.abs(rel_pos)
    max_exact = num_buckets // 2
    is_small = n < max_exact
    n_f = jnp.maximum(n, 1).astype(jnp.float32)
    val_if_large = max_exact + (
        jnp.log(n_f / max_exact) / math.log(max_distance / max_exact)
        * (num_buckets - max_exact)
    ).astype(jnp.int32)
    val_if_large = jnp.minimum(val_if_large, num_buckets - 1)
    return buckets + jnp.where(is_small, n, val_if_large)


def compute_position_bias(rel_bias_table, seq_len, cfg):
    ctx = jnp.arange(seq_len, dtype=jnp.int32)[:, None]
    mem = jnp.arange(seq_len, dtype=jnp.int32)[None, :]
    buckets = _relative_position_bucket(mem - ctx,
                                        cfg["rel_buckets"], cfg["rel_max_dist"])
    bias = jnp.take(rel_bias_table, buckets, axis=0)              # (S, S, H)
    # Stored in bf16 (halves HBM read + resident VMEM footprint per layer).
    return jnp.transpose(bias, (2, 0, 1)).astype(jnp.bfloat16)    # (H, S, S)


def prepare_params(params):
    """One-time (load-time) weight prep: gamma folded into consuming weights,
    everything pre-cast to bf16, q/k/v pre-stacked.  No per-forward weight
    casting / concatenation traffic."""
    bf16 = jnp.bfloat16
    out = {"tok_emb": params["tok_emb"].astype(jnp.float32),
           "rel_bias": params["rel_bias"].astype(jnp.float32),
           "final_norm": params["final_norm"].astype(jnp.float32),
           "layers": []}
    for layer in params["layers"]:
        ga = layer["attn_norm"][:, None]
        gf = layer["ffn_norm"][:, None]
        wqkv = jnp.stack([ga * layer["wq"], ga * layer["wk"], ga * layer["wv"]],
                         axis=0)                                   # (3, D, inner)
        out["layers"].append({
            "wqkv": wqkv.astype(bf16),
            "wo": layer["wo"].astype(bf16),
            "wi0": (gf * layer["wi0"]).astype(bf16),
            "wi1": (gf * layer["wi1"]).astype(bf16),
            "wo_ff": layer["wo_ff"].astype(bf16),
        })
    return out


def t5_encoder_forward(prepped, input_ids, cfg, use_pallas=True):
    B, S = input_ids.shape
    D, H, Dh, F = cfg["d_model"], cfg["heads"], cfg["d_kv"], cfg["d_ff"]
    inner = H * Dh
    M = B * S
    bf16 = jnp.bfloat16

    # Embedding row-gather kept in plain-JAX glue (memory gather, not hot path).
    hidden = jnp.take(prepped["tok_emb"], input_ids.reshape(-1),
                      axis=0).astype(jnp.float32)                  # (M, D)
    pos_bias = compute_position_bias(prepped["rel_bias"], S, cfg)  # (H,S,S) bf16

    if use_pallas:
        # Normalized bf16 activation for the first layer; after that it is
        # produced by the residual-matmul epilogue (no standalone RMS passes).
        hidden_nrm = pallas_rms_bf16(hidden)
        # TODO(synk): cross-layer weight prefetch (cross-call semaphore futures)
        # not implemented; weights stream through each kernel's BlockSpec pipeline.
        for layer in prepped["layers"]:
            # --- self-attention block ---
            qkv = pallas_qkv_matmul(hidden_nrm, layer["wqkv"])     # (3,M,inner) bf16
            o = pallas_attention(qkv, pos_bias, B, S, H, Dh)       # (M,inner) bf16
            hidden, hidden_nrm = pallas_matmul_residual_norm(
                o, layer["wo"], hidden)
            # --- gated-GELU FFN block ---
            h = pallas_matmul_geglu(hidden_nrm, layer["wi0"], layer["wi1"])
            hidden, hidden_nrm = pallas_matmul_residual_norm(
                h, layer["wo_ff"], hidden)
        hidden = pallas_rmsnorm(hidden, prepped["final_norm"])
    else:
        # Pure-jnp reference with the same prepared (bf16, gamma-folded) weights
        # and the same f32-accumulate numerics as the Pallas path.
        def rms_scale(x):
            return jax.lax.rsqrt(jnp.mean(x * x, axis=-1, keepdims=True) + 1e-6)

        def heads(x):
            return x.reshape(B, S, H, Dh).transpose(0, 2, 1, 3)

        pos_f32 = pos_bias.astype(jnp.float32)
        for layer in prepped["layers"]:
            xn = (hidden * rms_scale(hidden)).astype(bf16)
            q = jnp.dot(xn, layer["wqkv"][0],
                        preferred_element_type=jnp.float32).astype(bf16)
            k = jnp.dot(xn, layer["wqkv"][1],
                        preferred_element_type=jnp.float32).astype(bf16)
            v = jnp.dot(xn, layer["wqkv"][2],
                        preferred_element_type=jnp.float32).astype(bf16)
            sc = jnp.einsum("bhqd,bhkd->bhqk", heads(q), heads(k),
                            preferred_element_type=jnp.float32) + pos_f32[None]
            p = jax.nn.softmax(sc, axis=-1).astype(bf16)
            o = jnp.einsum("bhqk,bhkd->bhqd", p, heads(v),
                           preferred_element_type=jnp.float32).astype(bf16)
            o = o.transpose(0, 2, 1, 3).reshape(M, inner)
            hidden = hidden + jnp.dot(o, layer["wo"],
                                      preferred_element_type=jnp.float32)
            xn = (hidden * rms_scale(hidden)).astype(bf16)
            a = jnp.dot(xn, layer["wi0"], preferred_element_type=jnp.float32)
            g = jnp.dot(xn, layer["wi1"], preferred_element_type=jnp.float32)
            gelu = 0.5 * a * (1.0 + jnp.tanh(0.7978845608028654
                                             * (a + 0.044715 * a * a * a)))
            h = (gelu * g).astype(bf16)
            hidden = hidden + jnp.dot(h, layer["wo_ff"],
                                      preferred_element_type=jnp.float32)
        hidden = (hidden * rms_scale(hidden)) * prepped["final_norm"][None, :]

    return hidden.reshape(B, S, D)   # == last_hidden_state


# ---------------------------- HFEmbedder wrapper ----------------------------

class HFEmbedderPallas:
    """JAX/Pallas analogue of sharktank HFEmbedder (T5 encoder branch)."""

    def __init__(self, version: str, max_length: int, params, cfg):
        self.is_clip = version == "clip"
        self.max_length = max_length
        self.output_key = "pooler_output" if self.is_clip else "last_hidden_state"
        if self.is_clip:
            # TODO(synk): CLIP text-model pooler_output branch not implemented; only T5 encoder path.
            raise NotImplementedError("CLIP branch not implemented")
        self.cfg = cfg
        self.prepped = prepare_params(params)   # one-time bf16/gamma-fold prep

    def __call__(self, input_ids):
        outputs = {"last_hidden_state":
                   t5_encoder_forward(self.prepped, input_ids, self.cfg)}
        return outputs[self.output_key]


# ----------------------------- param init ----------------------------------

def init_params(key, cfg):
    D, H, Dh, F = cfg["d_model"], cfg["heads"], cfg["d_kv"], cfg["d_ff"]
    inner = H * Dh
    ks = iter(jax.random.split(key, 8 + cfg["layers"] * 16))

    def w(shape):
        return (0.02 * jax.random.normal(next(ks), shape)).astype(jnp.float32)

    def norm(shape):   # non-trivial gamma to exercise the gamma-folding path
        return (1.0 + 0.05 * jax.random.normal(next(ks), shape)).astype(jnp.float32)

    params = {
        "tok_emb": w((cfg["vocab"], D)),
        "rel_bias": w((cfg["rel_buckets"], H)),
        "final_norm": norm((D,)),
        "layers": [],
    }
    for _ in range(cfg["layers"]):
        params["layers"].append({
            "attn_norm": norm((D,)),
            "wq": w((D, inner)), "wk": w((D, inner)), "wv": w((D, inner)),
            "wo": w((inner, D)),
            "ffn_norm": norm((D,)),
            "wi0": w((D, F)), "wi1": w((D, F)), "wo_ff": w((F, D)),
        })
    return params


# --------------------------------- main -------------------------------------

if __name__ == "__main__":
    cfg = dict(vocab=256, d_model=32, heads=4, d_kv=8, d_ff=64, layers=2,
               rel_buckets=32, rel_max_dist=128)
    max_length = 8
    batch = 2

    root = jax.random.PRNGKey(0)
    k_params, k_ids = jax.random.split(root)
    params = init_params(k_params, cfg)
    input_ids = jax.random.randint(k_ids, (batch, max_length), 0, cfg["vocab"],
                                   dtype=jnp.int32)

    embedder = HFEmbedderPallas("t5", max_length, params, cfg)
    out = embedder(input_ids)                       # (B, S, D) last_hidden_state
    out = jax.block_until_ready(out)

    # Sanity check against a pure-jnp reference using the same prepared weights.
    ref = jax.block_until_ready(
        t5_encoder_forward(embedder.prepped, input_ids, cfg, use_pallas=False))
    assert out.shape == (batch, max_length, cfg["d_model"])
    assert out.dtype == jnp.float32
    assert bool(jnp.all(jnp.isfinite(out)))
    assert jnp.allclose(out, ref, rtol=2e-2, atol=2e-2), "Pallas/ref mismatch"

    print("KERNEL_OK")
</pallas_src>

<mosaic_0001>
module attributes {stable_mosaic.version = 11 : i64} {
  func.func @_rms_bf16_kernel(%arg0: i32, %arg1: memref<16x32xf32, #tpu.memory_space<vmem>>, %arg2: memref<16x32xbf16, #tpu.memory_space<vmem>>) attributes {dimension_semantics = [#tpu.dimension_semantics<parallel>], iteration_bounds = array<i64: 1>, scalar_prefetch = 0 : i64, scratch_operands = 0 : i64, tpu.core_type = #tpu.core_type<tc>, window_params = [{transform_indices = @transform_0, window_bounds = array<i64: 16, 32>}, {transform_indices = @transform_1, window_bounds = array<i64: 16, 32>}]} {
    %c0 = arith.constant 0 : index
    %c0_0 = arith.constant 0 : index
    %0 = vector.load %arg1[%c0, %c0_0] : memref<16x32xf32, #tpu.memory_space<vmem>>, vector<16x32xf32>
    %1 = arith.mulf %0, %0 : vector<16x32xf32>
    %cst = arith.constant dense<0.000000e+00> : vector<16xf32>
    %2 = vector.multi_reduction <add>, %1, %cst [1] : vector<16x32xf32> to vector<16xf32>
    %3 = vector.shape_cast %2 : vector<16xf32> to vector<16x1xf32>
    %cst_1 = arith.constant 3.200000e+01 : f32
    %4 = vector.broadcast %cst_1 : f32 to vector<16x1xf32>
    %5 = arith.divf %3, %4 : vector<16x1xf32>
    %cst_2 = arith.constant 9.99999997E-7 : f32
    %6 = vector.broadcast %cst_2 : f32 to vector<16x1xf32>
    %7 = arith.addf %5, %6 : vector<16x1xf32>
    %8 = math.rsqrt %7 : vector<16x1xf32>
    %9 = vector.broadcast %8 : vector<16x1xf32> to vector<16x32xf32>
    %10 = arith.mulf %0, %9 : vector<16x32xf32>
    %11 = arith.truncf %10 : vector<16x32xf32> to vector<16x32xbf16>
    %c0_3 = arith.constant 0 : index
    %c0_4 = arith.constant 0 : index
    %12 = vector.load %arg2[%c0_3, %c0_4] : memref<16x32xbf16, #tpu.memory_space<vmem>>, vector<16x32xbf16>
    tpu.vector_store %arg2[%c0_3, %c0_4], %11 {strides = array<i32>} : memref<16x32xbf16, #tpu.memory_space<vmem>>, vector<16x32xbf16>,
    return
  }
  func.func @transform_0(%arg0: i32) -> (i32, i32) {
    %c0_i32 = arith.constant 0 : i32
    %c0_i32_0 = arith.constant 0 : i32
    return %arg0, %c0_i32 : i32, i32
  }
  func.func @transform_1(%arg0: i32) -> (i32, i32) {
    %c0_i32 = arith.constant 0 : i32
    %c0_i32_0 = arith.constant 0 : i32
    return %arg0, %c0_i32 : i32, i32
  }
}

</mosaic_0001>

<llo_original>
// kernel: tpu_custom_call.1
$region0: #{tpu_custom_call.1}
  #allocation0 [shape = 'u32[]', space=smem, size = 0x4, offset = 0x4, fixed_abs, tag = 'smem constant byte address 0x4 - core index']
  #allocation1 [shape = 'u32[72,128]{1,0:T(1,128)}', space=vmem, size = 0x9000, scoped, tag = 'internal scratch']
  %s0 = inlined_call_operand.hbm [shape: f32[16,32], index: 0, kind: input, shape index: {}]
  %s1 = inlined_call_operand.hbm [shape: bf16[16,32], index: 1, kind: output, shape index: {}]
  %s2 = sld [smem:[#allocation0]]
  $region18: #{tpu_custom_call.1} parent=0
    _
  %s4 = ssub.s32 1, %s2
  %s5 = scalar_select 0, %s4, %s2
  $region1: #{tpu_custom_call.1} parent=0
    #allocation2 [shape = 'u8[8192]{0}', space=vmem, size = 0x2000, scoped, tag = 'input window, operand 0, single buffered']
    #allocation3 [shape = 's32[1]{0}', space=sflag, size = 0x4, scoped, tag = 'scoped memory for tpu_custom_call.1']
    #allocation4 [shape = 's32[1]{0}', space=sflag, size = 0x4, scoped, tag = 'scoped memory for tpu_custom_call.1']
    #allocation5 [shape = 'u8[4096]{0}', space=vmem, size = 0x1000, scoped, tag = 'output window, operand 0, single buffered']
    %6 = vsyncpa [#allocation3], 0
    %7 = vsyncpa [#allocation4], 0
    // Predicated region
    $region2: #{tpu_custom_call.1} parent=1 // pred_check
      _
    $region3: #{tpu_custom_call.1} parent=1 // pred_check_branch
      %9 = sbr.rel (0) target = $region5
    $region4: #{tpu_custom_call.1} parent=1 // pred_region
      %11 = vsyncadd [#allocation3], 0
      %s12 = sshll.u32 %s0, 4
      %s13 = int_to_ptr.hbm [resolvable:$true] %s12
      %s14 = sshll.u32 [#allocation2], 4
      %s15 = int_to_ptr.vmem [resolvable:$true] %s14
      %20 = dma.hbm_to_vmem [thread:$0]  %s13, 256, %s15, [#allocation3], 128, 128, 8
    $region5: #{tpu_custom_call.1} parent=1 // pred_fallthru
      _
    // Predicated region
    $region6: #{tpu_custom_call.1} parent=1 // pred_check
      _
    $region7: #{tpu_custom_call.1} parent=1 // pred_check_branch
      %22 = sbr.rel (0) target = $region9
    $region8: #{tpu_custom_call.1} parent=1 // pred_region
      %24 = dma.done [#allocation3], 256
    $region9: #{tpu_custom_call.1} parent=1 // pred_fallthru
      _
    %v25 = vld [vmem:[#allocation2] sm:$0xff]
    %v26 = vld [vmem:[#allocation2 + $0x8] sm:$0xff]
    %v27 = vmul.f32 %v25, %v25
    %v28 = vmul.f32 %v26, %v26
    %vm29 = vcmask 261120
    %v30 = vsel %vm29, %v27, 0.0
    %31 = vadd.xlane.f32.xlu0 %v30
    %v32 = vpop.xlane.xlu0 %31
    %v33 = vsel %vm29, %v28, 0.0
    %34 = vadd.xlane.f32.xlu0 %v33
    %v35 = vpop.xlane.xlu0 %34
    %v36 = vrcp.pop 32.0
    %v37 = vmul.f32 32.0, %v36
    %v38 = vsub.f32 1.0, %v37
    %v39 = vmul.f32 %v36, %v38
    %v40 = vadd.f32 %v36, %v39
    %vm41 = vweird.f32 %v36
    %v42 = vsel %vm41, %v36, %v40
    %v43 = vmul.f32 %v32, %v42
    %v44 = vmul.f32 %v35, %v42
    %v45 = vadd.f32 %v43, 1e-06
    %v46 = vadd.f32 %v44, 1e-06
    %v47 = vrsqrt.pop %v45
    %v48 = vmul.f32 %v47, %v45
    %v49 = vmul.f32 %v48, %v47
    %v50 = vmul.f32 0.5, %v49
    %v51 = vsub.f32 1.5, %v50
    %v52 = vmul.f32 %v47, %v51
    %vm53 = vweird.f32 %v45
    %vm54 = vweird.f32 %v47
    %vm55 = vmor %vm53, %vm54
    %v56 = vsel %vm55, %v47, %v52
    %v57 = vrsqrt.pop %v46
    %v58 = vmul.f32 %v57, %v46
    %v59 = vmul.f32 %v58, %v57
    %v60 = vmul.f32 0.5, %v59
    %v61 = vsub.f32 1.5, %v60
    %v62 = vmul.f32 %v57, %v61
    %vm63 = vweird.f32 %v46
    %vm64 = vweird.f32 %v57
    %vm65 = vmor %vm63, %vm64
    %v66 = vsel %vm65, %v57, %v62
    %v67 = vmul.f32 %v25, %v56
    %v68 = vmul.f32 %v26, %v66
    %v69 = vpack.c.bf16 %v67, %v67
    %v70 = vpack.c.bf16 %v68, %v68
    %vm71 = vcmask 257024
    %72 = vst.msk [vmem:[#allocation5] sm:$0xf] %vm71, %v69
    %73 = vst.msk [vmem:[#allocation5 + $0x4] sm:$0xf] %vm71, %v70
    // Predicated region
    $region10: #{tpu_custom_call.1} parent=1 // pred_check
      _
    $region11: #{tpu_custom_call.1} parent=1 // pred_check_branch
      %75 = sbr.rel (0) target = $region13
    $region12: #{tpu_custom_call.1} parent=1 // pred_region
      %77 = vsyncadd [#allocation4], 0
      %s78 = sshll.u32 [#allocation5], 4
      %s79 = int_to_ptr.vmem [resolvable:$true] %s78
      %s80 = sshll.u32 %s1, 4
      %s81 = int_to_ptr.hbm [resolvable:$true] %s80
      %86 = dma.vmem_to_hbm [thread:$0]  %s79, 128, %s81, [#allocation4], 64, 64, 4
    $region13: #{tpu_custom_call.1} parent=1 // pred_fallthru
      _
    // Predicated region
    $region14: #{tpu_custom_call.1} parent=1 // pred_check
      _
    $region15: #{tpu_custom_call.1} parent=1 // pred_check_branch
      %88 = sbr.rel (0) target = $region17
    $region16: #{tpu_custom_call.1} parent=1 // pred_region
      %90 = dma.done [#allocation4], 128
    $region17: #{tpu_custom_call.1} parent=1 // pred_fallthru
      _
    %91 = vsyncpa [#allocation3], 1
    %92 = vsyncpa [#allocation4], 1

</llo_original>
